<compile_context>
chip_gen: v6e
topology: v6e:2x2x1
jax: 0.10.0
libtpu: 0.0.40
codegen_flags: <defaults>
</compile_context>

<pallas_src>
from typing import NamedTuple

import jax
import jax.numpy as jnp
from jax.experimental import pallas as pl
from jax.experimental.pallas import tpu as pltpu


def _round_up(x, m):
    return (x + m - 1) // m * m


def _sublane_multiple(dtype):
    # 8 rows/sublane-group for 4-byte, 16 for 2-byte, 32 for 1-byte dtypes.
    return {1: 32, 2: 16, 4: 8}.get(jnp.dtype(dtype).itemsize, 8)


def _default_tile_sizes():
    """Per-generation defaults: v6e/v7x need >=512-row tiles to be compute-bound on W."""
    kind = ""
    try:
        kind = jax.devices()[0].device_kind.lower()
    except Exception:
        pass
    if "v5 lite" in kind or "v5e" in kind or "v5lite" in kind:
        return 256, 256
    return 512, 512


_VMEM_BUDGET_BYTES = 40 * 1024 * 1024   # conservative so v7x's 64 MiB/TC keeps headroom


def _vmem_bytes(tile_m, tile_n, H, R_pad, itemsize):
    """Rough resident-set estimate: double-buffered tiles + VMEM scratch."""
    dbl = 2 * itemsize * (tile_m * H        # x row tile
                          + H * tile_n      # W column tile
                          + tile_n          # bias tile
                          + H * R_pad       # A_all
                          + R_pad * tile_n  # B_all column tile
                          + tile_m * tile_n)  # output tile
    dbl += 2 * 4 * (tile_m * 128 + 8 * 128)   # int32 idx / rank-adapter blocks (lane-padded)
    return dbl + itemsize * tile_m * R_pad    # v scratch


# --------------------------------- kernels ---------------------------------

def _lora_kernel_carry(idx_ref, ra_ref, x_ref, w_ref, bias_ref, a_ref, b_ref,
                       out_ref, v_ref):
    """Carry variant: masked shrink v computed once per row tile (n == 0), kept in VMEM."""
    @pl.when(pl.program_id(1) == 0)
    def _():
        mask = (idx_ref[...] == ra_ref[...]).astype(jnp.float32)     # (tile_m, R_pad)
        v = jnp.dot(x_ref[...], a_ref[...], preferred_element_type=jnp.float32)
        v_ref[...] = (v * mask).astype(v_ref.dtype)                  # single cast; native expand

    base = jnp.dot(x_ref[...], w_ref[...], preferred_element_type=jnp.float32)
    lora = jnp.dot(v_ref[...], b_ref[...], preferred_element_type=jnp.float32)
    out_ref[...] = (base + bias_ref[...].astype(jnp.float32) + lora).astype(out_ref.dtype)


def _lora_kernel_flat(idx_ref, ra_ref, x_ref, w_ref, bias_ref, a_ref, b_ref, out_ref):
    """No-carry variant (decode / single row tile): both grid axes can be 'parallel'."""
    mask = (idx_ref[...] == ra_ref[...]).astype(jnp.float32)
    v = jnp.dot(x_ref[...], a_ref[...], preferred_element_type=jnp.float32) * mask
    base = jnp.dot(x_ref[...], w_ref[...], preferred_element_type=jnp.float32)
    lora = jnp.dot(v.astype(b_ref.dtype), b_ref[...], preferred_element_type=jnp.float32)
    out_ref[...] = (base + bias_ref[...].astype(jnp.float32) + lora).astype(out_ref.dtype)


# --------------------------- load-time weight prep ---------------------------

class PreparedLoraWeights(NamedTuple):
    w: jax.Array             # (H, Np)   base weight, padded to tile_n multiple, compute dtype
    bias: jax.Array          # (1, Np)
    a_all: jax.Array         # (H, R_pad)  stacked LoRA A, columns = (layer, adapter, rank)
    b_all: jax.Array         # (R_pad, Np) block-diagonal stacked LoRA B
    rank_adapter: jax.Array  # (1, R_pad) int32: adapter id owning each rank column (-2 = pad)
    n_out: int               # original output width N
    tile_n: int


def prepare_multi_adapter_weights(w, bias, lora_a_list, lora_b_list, *,
                                  dtype=None, tile_n=None):
    """One-time packing of base + LoRA weights (call at weight-load time, not per forward)."""
    H, N = w.shape
    dtype = w.dtype if dtype is None else dtype
    if tile_n is None:
        _, tile_n = _default_tile_sizes()
    tile_n = max(128, _round_up(min(tile_n, _round_up(N, 128)), 128))
    Np = _round_up(N, tile_n)
    sub = _sublane_multiple(dtype)

    # Stacked LoRA A: (H, R_total), column order = (layer, adapter, rank).
    a_cols, ra_cols = [], []
    for a_i in lora_a_list:                                   # (K, H, r_i)
        k_i, _, r_i = a_i.shape
        a_cols.append(jnp.transpose(a_i, (1, 0, 2)).reshape(H, k_i * r_i))
        ra_cols.append(jnp.repeat(jnp.arange(k_i, dtype=jnp.int32), r_i))
    a_all = jnp.concatenate(a_cols, axis=1).astype(dtype)
    rank_adapter = jnp.concatenate(ra_cols)
    R_total = a_all.shape[1]
    R_pad = max(_round_up(R_total, sub), sub)
    if R_pad > R_total:
        a_all = jnp.pad(a_all, ((0, 0), (0, R_pad - R_total)))
        rank_adapter = jnp.pad(rank_adapter, (0, R_pad - R_total), constant_values=-2)
    rank_adapter = rank_adapter.reshape(1, R_pad)

    # Block-diagonal stacked LoRA B: rows match a_all columns, cols = output features.
    b_all = jnp.zeros((R_pad, Np), dtype)
    row_off = col_off = 0
    for b_i in lora_b_list:                                   # (K, r_i, size_i)
        k_i, r_i, sz_i = b_i.shape
        b_all = b_all.at[row_off:row_off + k_i * r_i,
                         col_off:col_off + sz_i].set(
            b_i.reshape(k_i * r_i, sz_i).astype(dtype))
        row_off += k_i * r_i
        col_off += sz_i

    w_p = w.astype(dtype)                                     # keep W in compute dtype (MXU path)
    if Np > N:
        w_p = jnp.pad(w_p, ((0, 0), (0, Np - N)))
    if bias is None:
        bias = jnp.zeros((N,), dtype)
    bias2d = jnp.pad(bias.astype(dtype), (0, Np - N)).reshape(1, Np)

    return PreparedLoraWeights(w=w_p, bias=bias2d, a_all=a_all, b_all=b_all,
                               rank_adapter=rank_adapter, n_out=N, tile_n=tile_n)


# --------------------------------- forward ---------------------------------

def tensor_parallel_multi_adapter_linear(x, adapter_indices, prepared, *, tile_m=None):
    """x: (B, S, H) or (T, H); adapter_indices: (T,) int. Returns base(x) + masked LoRA."""
    w_p, bias2d, a_all, b_all, rank_adapter, N, tile_n = prepared
    H, Np = w_p.shape
    R_pad = a_all.shape[1]
    dtype = w_p.dtype
    itemsize = jnp.dtype(dtype).itemsize

    orig_shape = x.shape
    is_3d = x.ndim >= 3
    x2d = x.reshape(-1, x.shape[-1]) if is_3d else x
    T = x2d.shape[0]
    assert x2d.shape[1] == H
    assert adapter_indices.shape[0] == T
    x2d = x2d.astype(dtype)                     # consistent dtype -> native MXU path

    sub = _sublane_multiple(dtype)
    if tile_m is None:
        tile_m, _ = _default_tile_sizes()
    tile_m = max(sub, min(_round_up(tile_m, sub), _round_up(T, sub)))
    # Shrink tile_m under VMEM pressure (v7x: 64 MiB per TensorCore).
    while (_vmem_bytes(tile_m, tile_n, H, R_pad, itemsize) > _VMEM_BUDGET_BYTES
           and tile_m > 256):
        tile_m = _round_up(max(tile_m // 2, 256), sub)
    Tp = _round_up(T, tile_m)

    idx = adapter_indices.astype(jnp.int32).reshape(-1, 1)
    if Tp > T:
        x2d = jnp.pad(x2d, ((0, Tp - T), (0, 0)))
        idx = jnp.pad(idx, ((0, Tp - T), (0, 0)), constant_values=-1)

    grid = (Tp // tile_m, Np // tile_n)
    use_carry = grid[0] > 1 and grid[1] > 1
    if use_carry:
        kernel = _lora_kernel_carry
        scratch = [pltpu.VMEM((tile_m, R_pad), dtype)]        # v cached in compute dtype
        semantics = ("parallel", "arbitrary")
    else:
        # Decode / single row tile: recompute the (cheap) shrink each step so both axes
        # are parallel and both v7x TensorCores get output-column tiles.
        kernel = _lora_kernel_flat
        scratch = []
        semantics = ("parallel", "parallel")

    est = _vmem_bytes(tile_m, tile_n, H, R_pad, itemsize)
    vmem_limit = int(min(max(est * 5 // 4, 32 * 1024 * 1024), 56 * 1024 * 1024))

    out = pl.pallas_call(
        kernel,
        out_shape=jax.ShapeDtypeStruct((Tp, Np), dtype),
        grid_spec=pltpu.PrefetchScalarGridSpec(
            num_scalar_prefetch=0,
            grid=grid,
            in_specs=[
                pl.BlockSpec((tile_m, 1), lambda m, n: (m, 0)),      # adapter index per token
                pl.BlockSpec((1, R_pad), lambda m, n: (0, 0)),       # adapter id per rank col
                pl.BlockSpec((tile_m, H), lambda m, n: (m, 0)),      # x row tile
                pl.BlockSpec((H, tile_n), lambda m, n: (0, n)),      # base weight column tile
                pl.BlockSpec((1, tile_n), lambda m, n: (0, n)),      # bias column tile
                pl.BlockSpec((H, R_pad), lambda m, n: (0, 0)),       # stacked LoRA A
                pl.BlockSpec((R_pad, tile_n), lambda m, n: (0, n)),  # block-diag stacked LoRA B
            ],
            out_specs=pl.BlockSpec((tile_m, tile_n), lambda m, n: (m, n)),
            scratch_shapes=scratch,
        ),
        compiler_params=pltpu.CompilerParams(
            dimension_semantics=semantics,
            vmem_limit_bytes=vmem_limit,
        ),
    )(idx, rank_adapter, x2d, w_p, bias2d, a_all, b_all)

    out = out[:T, :N]
    if is_3d:
        out = out.reshape(orig_shape[:-1] + (N,))
    return out


# --------------------------------- demo / test ---------------------------------

def _reference(x, w, bias, lora_a_list, lora_b_list, adapter_indices, sizes):
    x2d = x.reshape(-1, x.shape[-1])
    ref = x2d @ w + bias[None, :]
    offset = 0
    for i, size in enumerate(sizes):
        for k in range(lora_a_list[i].shape[0]):
            m = (adapter_indices == k).astype(x2d.dtype)[:, None]
            upd = ((x2d @ lora_a_list[i][k]) @ lora_b_list[i][k]) * m
            ref = ref.at[:, offset:offset + size].add(upd)
        offset += size
    return ref.reshape(x.shape[:-1] + (w.shape[1],))


if __name__ == "__main__":
    key = jax.random.PRNGKey(0)

    batch, seq, hidden = 2, 64, 64
    sizes = (128, 128)                    # e.g. fused [q_proj, k_proj] column slices
    total_out = sum(sizes)                # 256
    rank = 8
    num_adapters = 3

    ks = jax.random.split(key, 9)
    x = jax.random.normal(ks[0], (batch, seq, hidden), jnp.float32)
    w = jax.random.normal(ks[1], (hidden, total_out), jnp.float32) * 0.05
    bias = jax.random.normal(ks[2], (total_out,), jnp.float32) * 0.01

    lora_a_list = [
        jax.random.normal(ks[3], (num_adapters, hidden, rank), jnp.float32) * 0.1,
        jax.random.normal(ks[4], (num_adapters, hidden, rank), jnp.float32) * 0.1,
    ]
    lora_b_list = [
        jax.random.normal(ks[5], (num_adapters, rank, sizes[0]), jnp.float32) * 0.1,
        jax.random.normal(ks[6], (num_adapters, rank, sizes[1]), jnp.float32) * 0.1,
    ]
    adapter_indices = jax.random.randint(ks[7], (batch * seq,), 0, num_adapters)

    # One-time (weight-load-time) packing; hoisted out of the forward call.
    prepared = prepare_multi_adapter_weights(
        w, bias, lora_a_list, lora_b_list, dtype=jnp.float32, tile_n=128)

    # Prefill-like call: 128 tokens, tile_m=64 -> 2x2 grid, carry kernel
    # (parallel row axis + sequential output-column axis with the VMEM v carry).
    out = tensor_parallel_multi_adapter_linear(x, adapter_indices, prepared, tile_m=64)
    out = jax.block_until_ready(out)
    ref = _reference(x, w, bias, lora_a_list, lora_b_list, adapter_indices, sizes)
    assert out.shape == (batch, seq, total_out)
    assert jnp.allclose(out, ref, atol=1e-3, rtol=1e-3)

    # Decode-like call: 8 tokens -> single row tile, no-carry kernel with both grid
    # axes "parallel" so v7x's second TensorCore gets the other output-column tile.
    x_dec = x[:, :4, :]
    idx_dec = jax.random.randint(ks[8], (batch * 4,), 0, num_adapters)
    out_dec = tensor_parallel_multi_adapter_linear(x_dec, idx_dec, prepared)
    out_dec = jax.block_until_ready(out_dec)
    ref_dec = _reference(x_dec, w, bias, lora_a_list, lora_b_list, idx_dec, sizes)
    assert out_dec.shape == (batch, 4, total_out)
    assert jnp.allclose(out_dec, ref_dec, atol=1e-3, rtol=1e-3)

    print("KERNEL_OK")
</pallas_src>

<mosaic_0001>
module attributes {stable_mosaic.version = 11 : i64} {
  func.func @_lora_kernel_carry(%arg0: i32, %arg1: i32, %arg2: memref<64x1xi32, #tpu.memory_space<vmem>>, %arg3: memref<1x48xi32, #tpu.memory_space<vmem>>, %arg4: memref<64x64xf32, #tpu.memory_space<vmem>>, %arg5: memref<64x128xf32, #tpu.memory_space<vmem>>, %arg6: memref<1x128xf32, #tpu.memory_space<vmem>>, %arg7: memref<64x48xf32, #tpu.memory_space<vmem>>, %arg8: memref<48x128xf32, #tpu.memory_space<vmem>>, %arg9: memref<64x128xf32, #tpu.memory_space<vmem>>, %arg10: memref<64x48xf32, #tpu.memory_space<vmem>>) attributes {dimension_semantics = [#tpu.dimension_semantics<parallel>, #tpu.dimension_semantics<arbitrary>], iteration_bounds = array<i64: 2, 2>, scalar_prefetch = 0 : i64, scratch_operands = 1 : i64, tpu.core_type = #tpu.core_type<tc>, window_params = [{transform_indices = @transform_0, window_bounds = array<i64: 64, 1>}, {pipeline_mode = #tpu.pipeline_mode<synchronous>, transform_indices = @transform_1, window_bounds = array<i64: 1, 48>}, {transform_indices = @transform_2, window_bounds = array<i64: 64, 64>}, {transform_indices = @transform_3, window_bounds = array<i64: 64, 128>}, {transform_indices = @transform_4, window_bounds = array<i64: 1, 128>}, {pipeline_mode = #tpu.pipeline_mode<synchronous>, transform_indices = @transform_5, window_bounds = array<i64: 64, 48>}, {transform_indices = @transform_6, window_bounds = array<i64: 48, 128>}, {transform_indices = @transform_7, window_bounds = array<i64: 64, 128>}]} {
    %c0_i32 = arith.constant 0 : i32
    %0 = arith.cmpi eq, %arg1, %c0_i32 : i32
    %1 = arith.extui %0 : i1 to i32
    %c0_i32_0 = arith.constant 0 : i32
    %2 = arith.cmpi ne, %1, %c0_i32_0 : i32
    scf.if %2 {
      %c0_13 = arith.constant 0 : index
      %c0_14 = arith.constant 0 : index
      %14 = vector.load %arg2[%c0_13, %c0_14] : memref<64x1xi32, #tpu.memory_space<vmem>>, vector<64x1xi32>
      %c0_15 = arith.constant 0 : index
      %c0_16 = arith.constant 0 : index
      %15 = vector.load %arg3[%c0_15, %c0_16] : memref<1x48xi32, #tpu.memory_space<vmem>>, vector<1x48xi32>
      %16 = vector.broadcast %14 : vector<64x1xi32> to vector<64x48xi32>
      %17 = vector.broadcast %15 : vector<1x48xi32> to vector<64x48xi32>
      %18 = arith.cmpi eq, %16, %17 : vector<64x48xi32>
      %19 = arith.extui %18 : vector<64x48xi1> to vector<64x48xi32>
      %20 = arith.sitofp %19 : vector<64x48xi32> to vector<64x48xf32>
      %c0_17 = arith.constant 0 : index
      %c0_18 = arith.constant 0 : index
      %21 = vector.load %arg4[%c0_17, %c0_18] : memref<64x64xf32, #tpu.memory_space<vmem>>, vector<64x64xf32>
      %c0_19 = arith.constant 0 : index
      %c0_20 = arith.constant 0 : index
      %22 = vector.load %arg7[%c0_19, %c0_20] : memref<64x48xf32, #tpu.memory_space<vmem>>, vector<64x48xf32>
      %cst_21 = arith.constant dense<0.000000e+00> : vector<64x48xf32>
      %23 = tpu.matmul %21, %22, %cst_21 {dimension_numbers = #tpu.dot_dimension_numbers<[1], [0], [0], [1], [0, 0, 1, 1], [], []>} : vector<64x64xf32>, vector<64x48xf32>, vector<64x48xf32> -> vector<64x48xf32>
      %24 = arith.mulf %23, %20 : vector<64x48xf32>
      %c0_22 = arith.constant 0 : index
      %c0_23 = arith.constant 0 : index
      %25 = vector.load %arg10[%c0_22, %c0_23] : memref<64x48xf32, #tpu.memory_space<vmem>>, vector<64x48xf32>
      tpu.vector_store %arg10[%c0_22, %c0_23], %24 {strides = array<i32>} : memref<64x48xf32, #tpu.memory_space<vmem>>, vector<64x48xf32>,
    } else {
    }
    %c0 = arith.constant 0 : index
    %c0_1 = arith.constant 0 : index
    %3 = vector.load %arg4[%c0, %c0_1] : memref<64x64xf32, #tpu.memory_space<vmem>>, vector<64x64xf32>
    %c0_2 = arith.constant 0 : index
    %c0_3 = arith.constant 0 : index
    %4 = vector.load %arg5[%c0_2, %c0_3] : memref<64x128xf32, #tpu.memory_space<vmem>>, vector<64x128xf32>
    %cst = arith.constant dense<0.000000e+00> : vector<64x128xf32>
    %5 = tpu.matmul %3, %4, %cst {dimension_numbers = #tpu.dot_dimension_numbers<[1], [0], [0], [1], [0, 0, 1, 1], [], []>} : vector<64x64xf32>, vector<64x128xf32>, vector<64x128xf32> -> vector<64x128xf32>
    %c0_4 = arith.constant 0 : index
    %c0_5 = arith.constant 0 : index
    %6 = vector.load %arg10[%c0_4, %c0_5] : memref<64x48xf32, #tpu.memory_space<vmem>>, vector<64x48xf32>
    %c0_6 = arith.constant 0 : index
    %c0_7 = arith.constant 0 : index
    %7 = vector.load %arg8[%c0_6, %c0_7] : memref<48x128xf32, #tpu.memory_space<vmem>>, vector<48x128xf32>
    %cst_8 = arith.constant dense<0.000000e+00> : vector<64x128xf32>
    %8 = tpu.matmul %6, %7, %cst_8 {dimension_numbers = #tpu.dot_dimension_numbers<[1], [0], [0], [1], [0, 0, 1, 1], [], []>} : vector<64x48xf32>, vector<48x128xf32>, vector<64x128xf32> -> vector<64x128xf32>
    %c0_9 = arith.constant 0 : index
    %c0_10 = arith.constant 0 : index
    %9 = vector.load %arg6[%c0_9, %c0_10] : memref<1x128xf32, #tpu.memory_space<vmem>>, vector<1x128xf32>
    %10 = vector.broadcast %9 : vector<1x128xf32> to vector<64x128xf32>
    %11 = arith.addf %5, %10 : vector<64x128xf32>
    %12 = arith.addf %11, %8 : vector<64x128xf32>
    %c0_11 = arith.constant 0 : index
    %c0_12 = arith.constant 0 : index
    %13 = vector.load %arg9[%c0_11, %c0_12] : memref<64x128xf32, #tpu.memory_space<vmem>>, vector<64x128xf32>
    tpu.vector_store %arg9[%c0_11, %c0_12], %12 {strides = array<i32>} : memref<64x128xf32, #tpu.memory_space<vmem>>, vector<64x128xf32>,
    return
  }
  func.func @transform_0(%arg0: i32, %arg1: i32) -> (i32, i32) {
    %c0_i32 = arith.constant 0 : i32
    %c0_i32_0 = arith.constant 0 : i32
    return %arg0, %c0_i32 : i32, i32
  }
  func.func @transform_1(%arg0: i32, %arg1: i32) -> (i32, i32) {
    %c0_i32 = arith.constant 0 : i32
    %c0_i32_0 = arith.constant 0 : i32
    %c0_i32_1 = arith.constant 0 : i32
    return %c0_i32, %c0_i32_0 : i32, i32
  }
  func.func @transform_2(%arg0: i32, %arg1: i32) -> (i32, i32) {
    %c0_i32 = arith.constant 0 : i32
    %c0_i32_0 = arith.constant 0 : i32
    return %arg0, %c0_i32 : i32, i32
  }
  func.func @transform_3(%arg0: i32, %arg1: i32) -> (i32, i32) {
    %c0_i32 = arith.constant 0 : i32
    %c0_i32_0 = arith.constant 0 : i32
    return %c0_i32, %arg1 : i32, i32
  }
  func.func @transform_4(%arg0: i32, %arg1: i32) -> (i32, i32) {
    %c0_i32 = arith.constant 0 : i32
    %c0_i32_0 = arith.constant 0 : i32
    return %c0_i32, %arg1 : i32, i32
  }
  func.func @transform_5(%arg0: i32, %arg1: i32) -> (i32, i32) {
    %c0_i32 = arith.constant 0 : i32
    %c0_i32_0 = arith.constant 0 : i32
    %c0_i32_1 = arith.constant 0 : i32
    return %c0_i32, %c0_i32_0 : i32, i32
  }
  func.func @transform_6(%arg0: i32, %arg1: i32) -> (i32, i32) {
    %c0_i32 = arith.constant 0 : i32
    %c0_i32_0 = arith.constant 0 : i32
    return %c0_i32, %arg1 : i32, i32
  }
  func.func @transform_7(%arg0: i32, %arg1: i32) -> (i32, i32) {
    %c0_i32 = arith.constant 0 : i32
    return %arg0, %arg1 : i32, i32
  }
}

</mosaic_0001>

<llo_original>
// kernel: tpu_custom_call.1
$region0: #{tpu_custom_call.1}
  #allocation0 [shape = 'u32[]', space=smem, size = 0x4, offset = 0x4, fixed_abs, tag = 'smem constant byte address 0x4 - core index']
  #allocation1 [shape = 'u32[144,128]{1,0:T(1,128)}', space=vmem, size = 0x12000, scoped, tag = 'internal scratch']
  #allocation2 [shape = 'f32[64,48]{1,0:T(8,128)}', space=vmem, size = 0x8000, scoped, tag = 'scratch operand']
  %s0 = inlined_call_operand.vmem [shape: s32[128,1], index: 0, kind: input, shape index: {}]
  %s1 = inlined_call_operand.vmem [shape: s32[1,48], index: 1, kind: input, shape index: {}]
  %s2 = inlined_call_operand.vmem [shape: f32[128,64], index: 2, kind: input, shape index: {}]
  %s3 = inlined_call_operand.vmem [shape: f32[64,256], index: 3, kind: input, shape index: {}]
  %s4 = inlined_call_operand.vmem [shape: f32[1,256], index: 4, kind: input, shape index: {}]
  %s5 = inlined_call_operand.vmem [shape: f32[64,48], index: 5, kind: input, shape index: {}]
  %s6 = inlined_call_operand.vmem [shape: f32[48,256], index: 6, kind: input, shape index: {}]
  %s7 = inlined_call_operand.hbm [shape: f32[128,256], index: 7, kind: output, shape index: {}]
  %s8 = sld [smem:[#allocation0]]
  $region141: #{tpu_custom_call.1} parent=0
    _
  %s10 = ssub.s32 1, %s8
  %s11 = scalar_select 0, %s10, %s8
  $region1: #{tpu_custom_call.1} parent=0
    #allocation3 [shape = 'u8[65536]{0}', space=vmem, size = 0x10000, scoped, tag = 'input window, operand 3']
    #allocation4 [shape = 'u8[49152]{0}', space=vmem, size = 0xc000, scoped, tag = 'input window, operand 6']
    #allocation5 [shape = 'u8[65536]{0}', space=vmem, size = 0x10000, scoped, tag = 'output window, operand 0']
    #allocation6 [shape = 's32[2]{0}', space=sflag, size = 0x8, scoped, tag = 'scoped memory for tpu_custom_call.1']
    %12 = vsyncpa [#allocation6], 0
    %s13 = scalar_lea.sflag [#allocation6], 1
    %14 = vsyncpa %s13, 0
    loop: start=0, step=1, limit=6
    $region2: #{tpu_custom_call.1} parent=1 // loop_pre_header
      _
    $region3: #{tpu_custom_call.1} parent=1 // loop_header
      %s16 = sphi 0, %s20
      %p17 = scmp.ge.s32.totalorder %s16, 6
      %s23 = sphi 0, %s35
      %s24 = sphi 0, %s31
      %s25 = sphi 0, %s23
      %s26 = sphi 0, %s24
      %s27 = sphi 0, %s25
      %s28 = sphi 0, %s26
      %s38 = sphi 0, %s40
      %s41 = sphi 0, %s38
      %s42 = sphi 0, %s41
      %s58 = sphi 0, %s42
      %s62 = sphi 0, %s62
      %s64 = sphi 0, %s62
      %s65 = sphi 0, %s64
      %s79 = sphi 0, %s65
      %s85 = sphi 0, %s87
      %s88 = sphi 0, %s85
      %s89 = sphi 0, %s88
      %s105 = sphi 0, %s89
      %s111 = sphi 0, %s113
      %s114 = sphi 0, %s111
      %s115 = sphi 0, %s114
      %s131 = sphi 0, %s115
      %s137 = sphi 0, %s139
      %s140 = sphi 0, %s137
      %s141 = sphi 0, %s140
      %s157 = sphi 0, %s141
      %s161 = sphi 0, %s161
      %s163 = sphi 0, %s161
      %s164 = sphi 0, %s163
      %s178 = sphi 0, %s164
      %s184 = sphi 0, %s186
      %s187 = sphi 0, %s184
      %s188 = sphi 0, %s187
      %s204 = sphi 0, %s188
      %s212 = sphi 0, %s214
      %s215 = sphi 0, %s212
      %s216 = sphi 0, %s215
      %s232 = sphi 0, %s216
    $region4: #{tpu_custom_call.1} parent=1 // loop_header_branch
      %19 = sbr.rel (%p17) target = $region8
    $region5: #{tpu_custom_call.1} parent=1 // loop_body
      %s21 = ssub.s32 %s16, 1
      %s22 = ssub.s32 %s16, 2
      %s29 = sadd.s32 1, %s24
      %p30 = scmp.ge.s32.totalorder %s29, 2
      %s31 = scalar_select %p30, 0, %s29
      %s32 = sadd.s32 1, %s23
      %s33 = scalar_select %p30, %s32, %s23
      %p34 = scmp.ge.s32.totalorder %s33, 2
      %s35 = scalar_select %p34, 0, %s33
      %s36 = ssub.s32 %s23, %s35
      %p37 = scmp.eq.s32.totalorder %s36, 0
      %s39 = sadd.s32 %s38, 1
      %s40 = scalar_select %p37, %s38, %s39
      %p43 = pneg %p37
      %p44 = scmp.eq.s32.totalorder %s16, 3
      %p45 = por %p43, %p44
      %p46 = scmp.ne.s32.totalorder %s38, %s41
      %p47 = scmp.eq.s32.totalorder %s16, 0
      %p48 = por %p46, %p47
      %p49 = scmp.ne.s32.totalorder %s38, %s41
      %p50 = scmp.eq.s32.totalorder %s21, 3
      %p51 = por %p49, %p50
      %p52 = scmp.ne.s32.totalorder %s41, %s42
      %p53 = scmp.eq.s32.totalorder %s21, 0
      %p54 = por %p52, %p53
      %p55 = scmp.ne.s32.totalorder %s41, %s42
      %p56 = scmp.eq.s32.totalorder %s22, 3
      %p57 = por %p55, %p56
      %p59 = scmp.ne.s32.totalorder %s42, %s58
      %p60 = scmp.eq.s32.totalorder %s22, 0
      %p61 = por %p59, %p60
      %s63 = sadd.s32 %s62, 1
      %p66 = scmp.eq.s32.totalorder %s16, 3
      %p67 = scmp.ne.s32.totalorder %s62, %s64
      %p68 = scmp.eq.s32.totalorder %s16, 0
      %p69 = por %p67, %p68
      %p70 = scmp.ne.s32.totalorder %s62, %s64
      %p71 = scmp.eq.s32.totalorder %s21, 3
      %p72 = por %p70, %p71
      %p73 = scmp.ne.s32.totalorder %s64, %s65
      %p74 = scmp.eq.s32.totalorder %s21, 0
      %p75 = por %p73, %p74
      %p76 = scmp.ne.s32.totalorder %s64, %s65
      %p77 = scmp.eq.s32.totalorder %s22, 3
      %p78 = por %p76, %p77
      %p80 = scmp.ne.s32.totalorder %s65, %s79
      %p81 = scmp.eq.s32.totalorder %s22, 0
      %p82 = por %p80, %p81
      %s83 = ssub.s32 %s23, %s35
      %p84 = scmp.eq.s32.totalorder %s83, 0
      %s86 = sadd.s32 %s85, 1
      %s87 = scalar_select %p84, %s85, %s86
      %p90 = pneg %p84
      %p91 = scmp.eq.s32.totalorder %s16, 3
      %p92 = por %p90, %p91
      %p93 = scmp.ne.s32.totalorder %s85, %s88
      %p94 = scmp.eq.s32.totalorder %s16, 0
      %p95 = por %p93, %p94
      %p96 = scmp.ne.s32.totalorder %s85, %s88
      %p97 = scmp.eq.s32.totalorder %s21, 3
      %p98 = por %p96, %p97
      %p99 = scmp.ne.s32.totalorder %s88, %s89
      %p100 = scmp.eq.s32.totalorder %s21, 0
      %p101 = por %p99, %p100
      %p102 = scmp.ne.s32.totalorder %s88, %s89
      %p103 = scmp.eq.s32.totalorder %s22, 3
      %p104 = por %p102, %p103
      %p106 = scmp.ne.s32.totalorder %s89, %s105
      %p107 = scmp.eq.s32.totalorder %s22, 0
      %p108 = por %p106, %p107
      %s109 = ssub.s32 %s24, %s31
      %p110 = scmp.eq.s32.totalorder %s109, 0
      %s112 = sadd.s32 %s111, 1
      %s113 = scalar_select %p110, %s111, %s112
      %p116 = pneg %p110
      %p117 = scmp.eq.s32.totalorder %s16, 3
      %p118 = por %p116, %p117
      %p119 = scmp.ne.s32.totalorder %s111, %s114
      %p120 = scmp.eq.s32.totalorder %s16, 0
      %p121 = por %p119, %p120
      %p122 = scmp.ne.s32.totalorder %s111, %s114
      %p123 = scmp.eq.s32.totalorder %s21, 3
      %p124 = por %p122, %p123
      %p125 = scmp.ne.s32.totalorder %s114, %s115
      %p126 = scmp.eq.s32.totalorder %s21, 0
      %p127 = por %p125, %p126
      %p128 = scmp.ne.s32.totalorder %s114, %s115
      %p129 = scmp.eq.s32.totalorder %s22, 3
      %p130 = por %p128, %p129
      %p132 = scmp.ne.s32.totalorder %s115, %s131
      %p133 = scmp.eq.s32.totalorder %s22, 0
      %p134 = por %p132, %p133
      %s135 = ssub.s32 %s24, %s31
      %p136 = scmp.eq.s32.totalorder %s135, 0
      %s138 = sadd.s32 %s137, 1
      %s139 = scalar_select %p136, %s137, %s138
      %p142 = pneg %p136
      %p143 = scmp.eq.s32.totalorder %s16, 3
      %p144 = por %p142, %p143
      %p145 = scmp.ne.s32.totalorder %s137, %s140
      %p146 = scmp.eq.s32.totalorder %s16, 0
      %p147 = por %p145, %p146
      %p148 = scmp.ne.s32.totalorder %s137, %s140
      %p149 = scmp.eq.s32.totalorder %s21, 3
      %p150 = por %p148, %p149
      %p151 = scmp.ne.s32.totalorder %s140, %s141
      %p152 = scmp.eq.s32.totalorder %s21, 0
      %p153 = por %p151, %p152
      %p154 = scmp.ne.s32.totalorder %s140, %s141
      %p155 = scmp.eq.s32.totalorder %s22, 3
      %p156 = por %p154, %p155
      %p158 = scmp.ne.s32.totalorder %s141, %s157
      %p159 = scmp.eq.s32.totalorder %s22, 0
      %p160 = por %p158, %p159
      %s162 = sadd.s32 %s161, 1
      %p165 = scmp.eq.s32.totalorder %s16, 3
      %p166 = scmp.ne.s32.totalorder %s161, %s163
      %p167 = scmp.eq.s32.totalorder %s16, 0
      %p168 = por %p166, %p167
      %p169 = scmp.ne.s32.totalorder %s161, %s163
      %p170 = scmp.eq.s32.totalorder %s21, 3
      %p171 = por %p169, %p170
      %p172 = scmp.ne.s32.totalorder %s163, %s164
      %p173 = scmp.eq.s32.totalorder %s21, 0
      %p174 = por %p172, %p173
      %p175 = scmp.ne.s32.totalorder %s163, %s164
      %p176 = scmp.eq.s32.totalorder %s22, 3
      %p177 = por %p175, %p176
      %p179 = scmp.ne.s32.totalorder %s164, %s178
      %p180 = scmp.eq.s32.totalorder %s22, 0
      %p181 = por %p179, %p180
      %s182 = ssub.s32 %s24, %s31
      %p183 = scmp.eq.s32.totalorder %s182, 0
      %s185 = sadd.s32 %s184, 1
      %s186 = scalar_select %p183, %s184, %s185
      %p189 = pneg %p183
      %p190 = scmp.eq.s32.totalorder %s16, 3
      %p191 = por %p189, %p190
      %p192 = scmp.ne.s32.totalorder %s184, %s187
      %p193 = scmp.eq.s32.totalorder %s16, 0
      %p194 = por %p192, %p193
      %p195 = scmp.ne.s32.totalorder %s184, %s187
      %p196 = scmp.eq.s32.totalorder %s21, 3
      %p197 = por %p195, %p196
      %p198 = scmp.ne.s32.totalorder %s187, %s188
      %p199 = scmp.eq.s32.totalorder %s21, 0
      %p200 = por %p198, %p199
      %p201 = scmp.ne.s32.totalorder %s187, %s188
      %p202 = scmp.eq.s32.totalorder %s22, 3
      %p203 = por %p201, %p202
      %p205 = scmp.ne.s32.totalorder %s188, %s204
      %p206 = scmp.eq.s32.totalorder %s22, 0
      %p207 = por %p205, %p206
      %s208 = ssub.s32 %s23, %s35
      %s209 = ssub.s32 %s24, %s31
      %s210 = sor.u32 %s208, %s209
      %p211 = scmp.eq.s32.totalorder %s210, 0
      %s213 = sadd.s32 %s212, 1
      %s214 = scalar_select %p211, %s212, %s213
      %p217 = pneg %p211
      %p218 = scmp.eq.s32.totalorder %s16, 3
      %p219 = por %p217, %p218
      %p220 = scmp.ne.s32.totalorder %s212, %s215
      %p221 = scmp.eq.s32.totalorder %s16, 0
      %p222 = por %p220, %p221
      %p223 = scmp.ne.s32.totalorder %s212, %s215
      %p224 = scmp.eq.s32.totalorder %s21, 3
      %p225 = por %p223, %p224
      %p226 = scmp.ne.s32.totalorder %s215, %s216
      %p227 = scmp.eq.s32.totalorder %s21, 0
      %p228 = por %p226, %p227
      %p229 = scmp.ne.s32.totalorder %s215, %s216
      %p230 = scmp.eq.s32.totalorder %s22, 3
      %p231 = por %p229, %p230
      %p233 = scmp.ne.s32.totalorder %s216, %s232
      %p234 = scmp.eq.s32.totalorder %s22, 0
      %p235 = por %p233, %p234
      %p236 = scmp.le.s32.totalorder 1, %s16
      %p237 = scmp.lt.s32.totalorder %s16, 5
      %p238 = pnand %p236, %p237
      %p239 = pneg %p238
      // Predicated region
      $region9: #{tpu_custom_call.1} parent=5 // pred_check
        _
      $region10: #{tpu_custom_call.1} parent=5 // pred_check_branch
        %241 = sbr.rel (%p238) target = $region12
      $region11: #{tpu_custom_call.1} parent=5 // pred_region
        %s242 = ssub.s32 %s16, 1
        // Predicated region
        $region13: #{tpu_custom_call.1} parent=11 // pred_check
          %p243 = pneg %p75
        $region14: #{tpu_custom_call.1} parent=11 // pred_check_branch
          %245 = sbr.rel (%p243) target = $region16
        $region15: #{tpu_custom_call.1} parent=11 // pred_region
          _
        $region16: #{tpu_custom_call.1} parent=11 // pred_fallthru
          _
        // Predicated region
        $region17: #{tpu_custom_call.1} parent=11 // pred_check
          %p246 = pneg %p174
        $region18: #{tpu_custom_call.1} parent=11 // pred_check_branch
          %248 = sbr.rel (%p246) target = $region20
        $region19: #{tpu_custom_call.1} parent=11 // pred_region
          _
        $region20: #{tpu_custom_call.1} parent=11 // pred_fallthru
          _
      $region12: #{tpu_custom_call.1} parent=5 // pred_fallthru
        _
      %p249 = scmp.lt.s32.totalorder %s16, 4
      // Predicated region
      $region21: #{tpu_custom_call.1} parent=5 // pred_check
        %p250 = pneg %p249
      $region22: #{tpu_custom_call.1} parent=5 // pred_check_branch
        %252 = sbr.rel (%p250) target = $region24
      $region23: #{tpu_custom_call.1} parent=5 // pred_region
        // Predicated region
        $region25: #{tpu_custom_call.1} parent=23 // pred_check
          %p253 = pneg %p48
        $region26: #{tpu_custom_call.1} parent=23 // pred_check_branch
          %255 = sbr.rel (%p253) target = $region28
        $region27: #{tpu_custom_call.1} parent=23 // pred_region
          %s256 = smul.u32 8, %s23
          %p257 = scmp.lt.s32.totalorder %s256, 15
          %s258 = scalar_select %p257, %s256, 15
          %s259 = smul.addr %s258, 8
          %s260 = scalar_lea.vmem %s0, %s259
          %s261 = smul.u32 8, %s23
        $region28: #{tpu_custom_call.1} parent=23 // pred_fallthru
          _
        // Predicated region
        $region29: #{tpu_custom_call.1} parent=23 // pred_check
          %p262 = pneg %p95
        $region30: #{tpu_custom_call.1} parent=23 // pred_check_branch
          %264 = sbr.rel (%p262) target = $region32
        $region31: #{tpu_custom_call.1} parent=23 // pred_region
          %s265 = smul.u32 8, %s23
          %p266 = scmp.lt.s32.totalorder %s265, 15
          %s267 = scalar_select %p266, %s265, 15
          %s268 = smul.addr %s267, 8
          %s269 = scalar_lea.vmem %s2, %s268
          %s270 = smul.u32 8, %s23
        $region32: #{tpu_custom_call.1} parent=23 // pred_fallthru
          _
        // Predicated region
        $region33: #{tpu_custom_call.1} parent=23 // pred_check
          %p271 = pneg %p121
        $region34: #{tpu_custom_call.1} parent=23 // pred_check_branch
          %273 = sbr.rel (%p271) target = $region36
        $region35: #{tpu_custom_call.1} parent=23 // pred_region
          %s274 = sand.u32 %s111, 1
          %s275 = sand.u32 %s111, 1
          %s276 = smul.addr %s275, 64
          %s277 = scalar_lea.vmem [#allocation3], %s276
          %s278 = smul.addr %s24, 8
          %s279 = scalar_lea.vmem %s3, %s278
          // Predicated region
          $region37: #{tpu_custom_call.1} parent=35 // pred_check
            _
          $region38: #{tpu_custom_call.1} parent=35 // pred_check_branch
            %281 = sbr.rel (0) target = $region40
          $region39: #{tpu_custom_call.1} parent=35 // pred_region
            // Predicated region
            $region41: #{tpu_custom_call.1} parent=39 // pred_check
              _
            $region42: #{tpu_custom_call.1} parent=39 // pred_check_branch
              %283 = sbr.rel (0) target = $region44
            $region43: #{tpu_custom_call.1} parent=39 // pred_region
              // Predicated region
              $region56: #{tpu_custom_call.1} parent=43 // pred_check
                _
              $region57: #{tpu_custom_call.1} parent=43 // pred_check_branch
                %313 = sbr.rel (0) target = $region59
              $region58: #{tpu_custom_call.1} parent=43 // pred_region
                loop: start=0, step=1, limit=1
                $region60: #{tpu_custom_call.1} parent=58 // loop_pre_header
                  _
                $region61: #{tpu_custom_call.1} parent=58 // loop_header
                  %s315 = sphi 0, %s319
                  %p316 = scmp.ge.s32.totalorder %s315, 1
                  %s320 = sphi %s279, %s279
                  %s321 = sphi %s277, %s277
                $region62: #{tpu_custom_call.1} parent=58 // loop_header_branch
                  %318 = sbr.rel (%p316) target = $region66
                $region63: #{tpu_custom_call.1} parent=58 // loop_body
                  %v322 = vld [vmem:[%s320] sm:$0xff]
                  %323 = vst [vmem:[%s321] sm:$0xff] %v322
                  %v324 = vld [vmem:[%s320 + $0x10] sm:$0xff]
                  %325 = vst [vmem:[%s321 + $0x8] sm:$0xff] %v324
                  %v326 = vld [vmem:[%s320 + $0x20] sm:$0xff]
                  %327 = vst [vmem:[%s321 + $0x10] sm:$0xff] %v326
                  %v328 = vld [vmem:[%s320 + $0x30] sm:$0xff]
                  %329 = vst [vmem:[%s321 + $0x18] sm:$0xff] %v328
                  %v330 = vld [vmem:[%s320 + $0x40] sm:$0xff]
                  %331 = vst [vmem:[%s321 + $0x20] sm:$0xff] %v330
                  %v332 = vld [vmem:[%s320 + $0x50] sm:$0xff]
                  %333 = vst [vmem:[%s321 + $0x28] sm:$0xff] %v332
                  %v334 = vld [vmem:[%s320 + $0x60] sm:$0xff]
                  %335 = vst [vmem:[%s321 + $0x30] sm:$0xff] %v334
                  %v336 = vld [vmem:[%s320 + $0x70] sm:$0xff]
                  %337 = vst [vmem:[%s321 + $0x38] sm:$0xff] %v336
                $region64: #{tpu_custom_call.1} parent=58 // loop_footer
                  %s319 = sadd.s32 1, %s315
                $region65: #{tpu_custom_call.1} parent=58 // loop_footer_branch
                  %314 = sbr.rel target = $region61
                $region66: #{tpu_custom_call.1} parent=58 // loop_exit
                  _
              $region59: #{tpu_custom_call.1} parent=43 // pred_fallthru
                _
              // Predicated region
              $region67: #{tpu_custom_call.1} parent=43 // pred_check
                _
              $region68: #{tpu_custom_call.1} parent=43 // pred_check_branch
                %339 = sbr.rel target = $region70
              $region69: #{tpu_custom_call.1} parent=43 // pred_region
                _
              $region70: #{tpu_custom_call.1} parent=43 // pred_fallthru
                _
            $region44: #{tpu_custom_call.1} parent=39 // pred_fallthru
              _
            // Predicated region
            $region45: #{tpu_custom_call.1} parent=39 // pred_check
              _
            $region46: #{tpu_custom_call.1} parent=39 // pred_check_branch
              %285 = sbr.rel target = $region48
            $region47: #{tpu_custom_call.1} parent=39 // pred_region
              %s287 = ssub.s32 256, 1
              loop: start=0, step=1, limit=1
              $region49: #{tpu_custom_call.1} parent=47 // loop_pre_header
                _
              $region50: #{tpu_custom_call.1} parent=47 // loop_header
                %s289 = sphi 0, %s293
                %p290 = scmp.ge.s32.totalorder %s289, 1
                %s294 = sphi %s279, %s279
                %s295 = sphi %s277, %s277
              $region51: #{tpu_custom_call.1} parent=47 // loop_header_branch
                %292 = sbr.rel (%p290) target = $region55
              $region52: #{tpu_custom_call.1} parent=47 // loop_body
                %v296 = vld [vmem:[%s294] sm:%s287]
                %297 = vst [vmem:[%s295] sm:%s287] %v296
                %v298 = vld [vmem:[%s294 + $0x10] sm:%s287]
                %299 = vst [vmem:[%s295 + $0x8] sm:%s287] %v298
                %v300 = vld [vmem:[%s294 + $0x20] sm:%s287]
                %301 = vst [vmem:[%s295 + $0x10] sm:%s287] %v300
                %v302 = vld [vmem:[%s294 + $0x30] sm:%s287]
                %303 = vst [vmem:[%s295 + $0x18] sm:%s287] %v302
                %v304 = vld [vmem:[%s294 + $0x40] sm:%s287]
                %305 = vst [vmem:[%s295 + $0x20] sm:%s287] %v304
                %v306 = vld [vmem:[%s294 + $0x50] sm:%s287]
                %307 = vst [vmem:[%s295 + $0x28] sm:%s287] %v306
                %v308 = vld [vmem:[%s294 + $0x60] sm:%s287]
                %309 = vst [vmem:[%s295 + $0x30] sm:%s287] %v308
                %v310 = vld [vmem:[%s294 + $0x70] sm:%s287]
                %311 = vst [vmem:[%s295 + $0x38] sm:%s287] %v310
              $region53: #{tpu_custom_call.1} parent=47 // loop_footer
                %s293 = sadd.s32 1, %s289
              $region54: #{tpu_custom_call.1} parent=47 // loop_footer_branch
                %288 = sbr.rel target = $region50
              $region55: #{tpu_custom_call.1} parent=47 // loop_exit
                _
            $region48: #{tpu_custom_call.1} parent=39 // pred_fallthru
              _
          $region40: #{tpu_custom_call.1} parent=35 // pred_fallthru
            _
          %340 = vnop
        $region36: #{tpu_custom_call.1} parent=23 // pred_fallthru
          _
        // Predicated region
        $region71: #{tpu_custom_call.1} parent=23 // pred_check
          %p341 = pneg %p147
        $region72: #{tpu_custom_call.1} parent=23 // pred_check_branch
          %343 = sbr.rel (%p341) target = $region74
        $region73: #{tpu_custom_call.1} parent=23 // pred_region
          %p344 = scmp.lt.s32.totalorder %s24, 1
          %s345 = scalar_select %p344, %s24, 1
          %s346 = scalar_lea.vmem %s4, %s345
        $region74: #{tpu_custom_call.1} parent=23 // pred_fallthru
          _
        // Predicated region
        $region75: #{tpu_custom_call.1} parent=23 // pred_check
          %p347 = pneg %p194
        $region76: #{tpu_custom_call.1} parent=23 // pred_check_branch
          %349 = sbr.rel (%p347) target = $region78
        $region77: #{tpu_custom_call.1} parent=23 // pred_region
          %s350 = sand.u32 %s184, 1
          %s351 = sand.u32 %s184, 1
          %s352 = smul.addr %s351, 48
          %s353 = scalar_lea.vmem [#allocation4], %s352
          %s354 = smul.addr %s24, 8
          %s355 = scalar_lea.vmem %s6, %s354
          // Predicated region
          $region79: #{tpu_custom_call.1} parent=77 // pred_check
            _
          $region80: #{tpu_custom_call.1} parent=77 // pred_check_branch
            %357 = sbr.rel (0) target = $region82
          $region81: #{tpu_custom_call.1} parent=77 // pred_region
            // Predicated region
            $region83: #{tpu_custom_call.1} parent=81 // pred_check
              _
            $region84: #{tpu_custom_call.1} parent=81 // pred_check_branch
              %359 = sbr.rel (0) target = $region86
            $region85: #{tpu_custom_call.1} parent=81 // pred_region
              // Predicated region
              $region98: #{tpu_custom_call.1} parent=85 // pred_check
                _
              $region99: #{tpu_custom_call.1} parent=85 // pred_check_branch
                %385 = sbr.rel (0) target = $region101
              $region100: #{tpu_custom_call.1} parent=85 // pred_region
                loop: start=0, step=1, limit=1
                $region102: #{tpu_custom_call.1} parent=100 // loop_pre_header
                  _
                $region103: #{tpu_custom_call.1} parent=100 // loop_header
                  %s387 = sphi 0, %s391
                  %p388 = scmp.ge.s32.totalorder %s387, 1
                  %s392 = sphi %s355, %s355
                  %s393 = sphi %s353, %s353
                $region104: #{tpu_custom_call.1} parent=100 // loop_header_branch
                  %390 = sbr.rel (%p388) target = $region108
                $region105: #{tpu_custom_call.1} parent=100 // loop_body
                  %v394 = vld [vmem:[%s392] sm:$0xff]
                  %395 = vst [vmem:[%s393] sm:$0xff] %v394
                  %v396 = vld [vmem:[%s392 + $0x10] sm:$0xff]
                  %397 = vst [vmem:[%s393 + $0x8] sm:$0xff] %v396
                  %v398 = vld [vmem:[%s392 + $0x20] sm:$0xff]
                  %399 = vst [vmem:[%s393 + $0x10] sm:$0xff] %v398
                  %v400 = vld [vmem:[%s392 + $0x30] sm:$0xff]
                  %401 = vst [vmem:[%s393 + $0x18] sm:$0xff] %v400
                  %v402 = vld [vmem:[%s392 + $0x40] sm:$0xff]
                  %403 = vst [vmem:[%s393 + $0x20] sm:$0xff] %v402
                  %v404 = vld [vmem:[%s392 + $0x50] sm:$0xff]
                  %405 = vst [vmem:[%s393 + $0x28] sm:$0xff] %v404
                $region106: #{tpu_custom_call.1} parent=100 // loop_footer
                  %s391 = sadd.s32 1, %s387
                $region107: #{tpu_custom_call.1} parent=100 // loop_footer_branch
                  %386 = sbr.rel target = $region103
                $region108: #{tpu_custom_call.1} parent=100 // loop_exit
                  _
              $region101: #{tpu_custom_call.1} parent=85 // pred_fallthru
                _
              // Predicated region
              $region109: #{tpu_custom_call.1} parent=85 // pred_check
                _
              $region110: #{tpu_custom_call.1} parent=85 // pred_check_branch
                %407 = sbr.rel target = $region112
              $region111: #{tpu_custom_call.1} parent=85 // pred_region
                _
              $region112: #{tpu_custom_call.1} parent=85 // pred_fallthru
                _
            $region86: #{tpu_custom_call.1} parent=81 // pred_fallthru
              _
            // Predicated region
            $region87: #{tpu_custom_call.1} parent=81 // pred_check
              _
            $region88: #{tpu_custom_call.1} parent=81 // pred_check_branch
              %361 = sbr.rel target = $region90
            $region89: #{tpu_custom_call.1} parent=81 // pred_region
              %s363 = ssub.s32 256, 1
              loop: start=0, step=1, limit=1
              $region91: #{tpu_custom_call.1} parent=89 // loop_pre_header
                _
              $region92: #{tpu_custom_call.1} parent=89 // loop_header
                %s365 = sphi 0, %s369
                %p366 = scmp.ge.s32.totalorder %s365, 1
                %s370 = sphi %s355, %s355
                %s371 = sphi %s353, %s353
              $region93: #{tpu_custom_call.1} parent=89 // loop_header_branch
                %368 = sbr.rel (%p366) target = $region97
              $region94: #{tpu_custom_call.1} parent=89 // loop_body
                %v372 = vld [vmem:[%s370] sm:%s363]
                %373 = vst [vmem:[%s371] sm:%s363] %v372
                %v374 = vld [vmem:[%s370 + $0x10] sm:%s363]
                %375 = vst [vmem:[%s371 + $0x8] sm:%s363] %v374
                %v376 = vld [vmem:[%s370 + $0x20] sm:%s363]
                %377 = vst [vmem:[%s371 + $0x10] sm:%s363] %v376
                %v378 = vld [vmem:[%s370 + $0x30] sm:%s363]
                %379 = vst [vmem:[%s371 + $0x18] sm:%s363] %v378
                %v380 = vld [vmem:[%s370 + $0x40] sm:%s363]
                %381 = vst [vmem:[%s371 + $0x20] sm:%s363] %v380
                %v382 = vld [vmem:[%s370 + $0x50] sm:%s363]
                %383 = vst [vmem:[%s371 + $0x28] sm:%s363] %v382
              $region95: #{tpu_custom_call.1} parent=89 // loop_footer
                %s369 = sadd.s32 1, %s365
              $region96: #{tpu_custom_call.1} parent=89 // loop_footer_branch
                %364 = sbr.rel target = $region92
              $region97: #{tpu_custom_call.1} parent=89 // loop_exit
                _
            $region90: #{tpu_custom_call.1} parent=81 // pred_fallthru
              _
          $region82: #{tpu_custom_call.1} parent=77 // pred_fallthru
            _
          %408 = vnop
        $region78: #{tpu_custom_call.1} parent=23 // pred_fallthru
          _
      $region24: #{tpu_custom_call.1} parent=5 // pred_fallthru
        _
      %p409 = scmp.le.s32.totalorder 1, %s16
      %p410 = scmp.lt.s32.totalorder %s16, 5
      %p411 = pnand %p409, %p410
      %p412 = pneg %p411
      // Predicated region
      $region113: #{tpu_custom_call.1} parent=5 // pred_check
        _
      $region114: #{tpu_custom_call.1} parent=5 // pred_check_branch
        %414 = sbr.rel (%p411) target = $region116
      $region115: #{tpu_custom_call.1} parent=5 // pred_region
        %s415 = ssub.s32 %s16, 1
        %s416 = sand.u32 %s114, 1
        %s417 = sand.u32 %s114, 1
        %s418 = smul.addr %s417, 64
        %s419 = scalar_lea.vmem [#allocation3], %s418
        // Predicated region
        $region117: #{tpu_custom_call.1} parent=115 // pred_check
          %p420 = pneg %p127
        $region118: #{tpu_custom_call.1} parent=115 // pred_check_branch
          %422 = sbr.rel (%p420) target = $region120
        $region119: #{tpu_custom_call.1} parent=115 // pred_region
          _
        $region120: #{tpu_custom_call.1} parent=115 // pred_fallthru
          _
        %s423 = sand.u32 %s187, 1
        %s424 = sand.u32 %s187, 1
        %s425 = smul.addr %s424, 48
        %s426 = scalar_lea.vmem [#allocation4], %s425
        // Predicated region
        $region121: #{tpu_custom_call.1} parent=115 // pred_check
          %p427 = pneg %p200
        $region122: #{tpu_custom_call.1} parent=115 // pred_check_branch
          %429 = sbr.rel (%p427) target = $region124
        $region123: #{tpu_custom_call.1} parent=115 // pred_region
          _
        $region124: #{tpu_custom_call.1} parent=115 // pred_fallthru
          _
        %s430 = smul.u32 8, %s25
        %p431 = scmp.lt.s32.totalorder %s430, 15
        %s432 = scalar_select %p431, %s430, 15
        %s433 = smul.addr %s432, 8
        %s434 = scalar_lea.vmem %s0, %s433
        %p435 = pneg %p54
        %p436 = pneg %p51
        %p437 = pneg %p75
        %p438 = pneg %p72
        %s439 = smul.u32 8, %s25
        %p440 = scmp.lt.s32.totalorder %s439, 15
        %s441 = scalar_select %p440, %s439, 15
        %s442 = smul.addr %s441, 8
        %s443 = scalar_lea.vmem %s2, %s442
        %p444 = pneg %p101
        %p445 = pneg %p98
        %s446 = sand.u32 %s114, 1
        %s447 = sand.u32 %s114, 1
        %s448 = smul.addr %s447, 64
        %s449 = scalar_lea.vmem [#allocation3], %s448
        %p450 = pneg %p127
        %p451 = pneg %p124
        %p452 = scmp.lt.s32.totalorder %s26, 1
        %s453 = scalar_select %p452, %s26, 1
        %s454 = scalar_lea.vmem %s4, %s453
        %p455 = pneg %p153
        %p456 = pneg %p150
        %p457 = pneg %p174
        %p458 = pneg %p171
        %s459 = sand.u32 %s187, 1
        %s460 = sand.u32 %s187, 1
        %s461 = smul.addr %s460, 48
        %s462 = scalar_lea.vmem [#allocation4], %s461
        %p463 = pneg %p200
        %p464 = pneg %p197
        %p465 = pneg %p228
        %p466 = pneg %p225
        %s467 = sand.u32 %s215, 1
        %s468 = scalar_lea.sflag [#allocation6], %s467
        %s469 = sand.u32 %s215, 1
        %s470 = smul.addr %s469, 64
        %s471 = scalar_lea.vmem [#allocation5], %s470
        %s472 = smul.u32 8, %s25
        %p473 = scmp.lt.s32.totalorder %s472, 15
        %s474 = scalar_select %p473, %s472, 15
        %s475 = smul.addr %s474, 8
        %s476 = scalar_lea.vmem %s0, %s475
        %s477 = smul.u32 8, %s25
        %s478 = smul.u32 8, %s25
        %p479 = scmp.lt.s32.totalorder %s478, 15
        %s480 = scalar_select %p479, %s478, 15
        %s481 = smul.addr %s480, 8
        %s482 = scalar_lea.vmem %s2, %s481
        %s483 = smul.u32 8, %s25
        %p484 = scmp.lt.s32.totalorder %s26, 1
        %s485 = scalar_select %p484, %s26, 1
        %s486 = scalar_lea.vmem %s4, %s485
        %s487 = smul.u32 8, %s25
        %p488 = scmp.eq.s32.totalorder %s26, 0
        // Predicated region
        $region125: #{tpu_custom_call.1} parent=115 // pred_check
          %p489 = pneg %p488
        $region126: #{tpu_custom_call.1} parent=115 // pred_check_branch
          %491 = sbr.rel (%p489) target = $region128
        $region127: #{tpu_custom_call.1} parent=115 // pred_region
          %v492 = vld [vmem:[%s476] sm:$0xff]
          %v493 = vld [vmem:[%s476 + $0x8] sm:$0xff]
          %v494 = vld [vmem:[%s476 + $0x10] sm:$0xff]
          %v495 = vld [vmem:[%s476 + $0x18] sm:$0xff]
          %v496 = vld [vmem:[%s476 + $0x20] sm:$0xff]
          %v497 = vld [vmem:[%s476 + $0x28] sm:$0xff]
          %v498 = vld [vmem:[%s476 + $0x30] sm:$0xff]
          %v499 = vld [vmem:[%s476 + $0x38] sm:$0xff]
          %v500 = vld [vmem:[%s1] sm:$0x1]
          %501 = vset.pattern.permute.xlu0 0
          %502 = vperm.xlu0 %501, %v492
          %v503 = vpop.permute.xlu0 %502
          %504 = vset.pattern.permute.xlu0 0
          %505 = vperm.xlu0 %504, %v493
          %v506 = vpop.permute.xlu0 %505
          %507 = vset.pattern.permute.xlu0 0
          %508 = vperm.xlu0 %507, %v494
          %v509 = vpop.permute.xlu0 %508
          %510 = vset.pattern.permute.xlu0 0
          %511 = vperm.xlu0 %510, %v495
          %v512 = vpop.permute.xlu0 %511
          %513 = vset.pattern.permute.xlu0 0
          %514 = vperm.xlu0 %513, %v496
          %v515 = vpop.permute.xlu0 %514
          %516 = vset.pattern.permute.xlu0 0
          %517 = vperm.xlu0 %516, %v497
          %v518 = vpop.permute.xlu0 %517
          %519 = vset.pattern.permute.xlu0 0
          %520 = vperm.xlu0 %519, %v498
          %v521 = vpop.permute.xlu0 %520
          %522 = vset.pattern.permute.xlu0 0
          %523 = vperm.xlu0 %522, %v499
          %v524 = vpop.permute.xlu0 %523
          %v525 = vlaneseq
          %v526 = vshrl.u32 %v525, 7
          %v527 = vsub.s32 0, %v526
          %v528 = vrot.slane %v500, %v527
          %vm529 = vcmp.eq.s32.totalorder %v503, %v528
          %vm530 = vcmp.eq.s32.totalorder %v506, %v528
          %vm531 = vcmp.eq.s32.totalorder %v509, %v528
          %vm532 = vcmp.eq.s32.totalorder %v512, %v528
          %vm533 = vcmp.eq.s32.totalorder %v515, %v528
          %vm534 = vcmp.eq.s32.totalorder %v518, %v528
          %vm535 = vcmp.eq.s32.totalorder %v521, %v528
          %vm536 = vcmp.eq.s32.totalorder %v524, %v528
          %v537 = vsel %vm529, 1, 0
          %v538 = vsel %vm530, 1, 0
          %v539 = vsel %vm531, 1, 0
          %v540 = vsel %vm532, 1, 0
          %v541 = vsel %vm533, 1, 0
          %v542 = vsel %vm534, 1, 0
          %v543 = vsel %vm535, 1, 0
          %v544 = vsel %vm536, 1, 0
          %v545 = vcvt.s32.f32 %v537
          %v546 = vcvt.s32.f32 %v538
          %v547 = vcvt.s32.f32 %v539
          %v548 = vcvt.s32.f32 %v540
          %v549 = vcvt.s32.f32 %v541
          %v550 = vcvt.s32.f32 %v542
          %v551 = vcvt.s32.f32 %v543
          %v552 = vcvt.s32.f32 %v544
          %v553 = vld [vmem:[%s482] sm:$0xff]
          %v554 = vld [vmem:[%s482 + $0x8] sm:$0xff]
          %v555 = vld [vmem:[%s482 + $0x10] sm:$0xff]
          %v556 = vld [vmem:[%s482 + $0x18] sm:$0xff]
          %v557 = vld [vmem:[%s482 + $0x20] sm:$0xff]
          %v558 = vld [vmem:[%s482 + $0x28] sm:$0xff]
          %v559 = vld [vmem:[%s482 + $0x30] sm:$0xff]
          %v560 = vld [vmem:[%s482 + $0x38] sm:$0xff]
          %v561 = vld [vmem:[%s5] sm:$0xff]
          %v562 = vld [vmem:[%s5 + $0x8] sm:$0xff]
          %v563 = vld [vmem:[%s5 + $0x10] sm:$0xff]
          %v564 = vld [vmem:[%s5 + $0x18] sm:$0xff]
          %v565 = vld [vmem:[%s5 + $0x20] sm:$0xff]
          %v566 = vld [vmem:[%s5 + $0x28] sm:$0xff]
          %v567 = vld [vmem:[%s5 + $0x30] sm:$0xff]
          %v568 = vld [vmem:[%s5 + $0x38] sm:$0xff]
          %vm569 = vcmask 523264
          %v571 = vsel %vm569, %v553, 0
          %v574 = vsel %vm569, %v554, 0
          %v577 = vsel %vm569, %v555, 0
          %v580 = vsel %vm569, %v556, 0
          %v583 = vsel %vm569, %v557, 0
          %v586 = vsel %vm569, %v558, 0
          %v589 = vsel %vm569, %v559, 0
          %v592 = vsel %vm569, %v560, 0
          %594 = vmatprep.subr.mxu0 0.0
          %595 = vmatpush1.msra.mxu0 0.0
          %596 = vmatprep.subr.mxu0 0.0
          %597 = vmatpush1.msra.mxu0 0.0
          %598 = vmatprep.subr.mxu0 0.0
          %599 = vmatpush1.msra.mxu0 0.0
          %600 = vmatprep.subr.mxu0 0.0
          %601 = vmatpush1.msra.mxu0 0.0
          %602 = vmatprep.subr.mxu0 0.0
          %603 = vmatpush1.msra.mxu0 0.0
          %604 = vmatprep.subr.mxu0 0.0
          %605 = vmatpush1.msra.mxu0 0.0
          %606 = vmatprep.subr.mxu0 0.0
          %607 = vmatpush1.msra.mxu0 0.0
          %608 = vmatprep.subr.mxu0 0.0
          %609 = vmatpush1.msra.mxu0 0.0
          %610 = vmatprep.subr.mxu0 0.0
          %611 = vmatpush1.msra.mxu0 %v568
          %612 = vmatprep.subr.mxu0 0.0
          %613 = vmatpush1.msra.mxu0 %v567
          %614 = vmatprep.subr.mxu0 0.0
          %615 = vmatpush1.msra.mxu0 %v566
          %616 = vmatprep.subr.mxu0 0.0
          %617 = vmatpush1.msra.mxu0 %v565
          %618 = vmatprep.subr.mxu0 0.0
          %619 = vmatpush1.msra.mxu0 %v564
          %620 = vmatprep.subr.mxu0 0.0
          %621 = vmatpush1.msra.mxu0 %v563
          %622 = vmatprep.subr.mxu0 0.0
          %623 = vmatpush1.msra.mxu0 %v562
          %624 = vmatprep.subr.mxu0 0.0
          %625 = vmatpush1.msra.mxu0 %v561
          %626 = vmatprep.subr.mxu0 0.0
          %627 = vmatpush2.msra.mxu0 0.0
          %628 = vmatprep.subr.mxu0 0.0
          %629 = vmatpush2.msra.mxu0 0.0
          %630 = vmatprep.subr.mxu0 0.0
          %631 = vmatpush2.msra.mxu0 0.0
          %632 = vmatprep.subr.mxu0 0.0
          %633 = vmatpush2.msra.mxu0 0.0
          %634 = vmatprep.subr.mxu0 0.0
          %635 = vmatpush2.msra.mxu0 0.0
          %636 = vmatprep.subr.mxu0 0.0
          %637 = vmatpush2.msra.mxu0 0.0
          %638 = vmatprep.subr.mxu0 0.0
          %639 = vmatpush2.msra.mxu0 0.0
          %640 = vmatprep.subr.mxu0 0.0
          %641 = vmatpush2.msra.mxu0 0.0
          %642 = vmatprep.subr.mxu0 0.0
          %643 = vmatpush2.msra.mxu0 0.0
          %644 = vmatprep.subr.mxu0 0.0
          %645 = vmatpush2.msra.mxu0 0.0
          %646 = vmatprep.subr.mxu0 0.0
          %647 = vmatpush2.msra.mxu0 0.0
          %648 = vmatprep.subr.mxu0 0.0
          %649 = vmatpush2.msra.mxu0 0.0
          %650 = vmatprep.subr.mxu0 0.0
          %651 = vmatpush2.msra.mxu0 0.0
          %652 = vmatprep.subr.mxu0 0.0
          %653 = vmatpush2.msra.mxu0 0.0
          %654 = vmatprep.subr.mxu0 0.0
          %655 = vmatpush2.msra.mxu0 0.0
          %656 = vmatprep.subr.mxu0 0.0
          %657 = vmatpush2.msra.mxu0 0.0
          %658 = vmatprep.mubr.f32.mxu0 0.0
          %659 = vmatmul.mubr.f32.gmra.mxu0 %v571
          %v660 = vpop.f32.mrf.mxu0
          %v661 = vadd.f32 0.0, %v660
          %v662 = vpop.f32.mrf.mxu0
          %663 = vmatprep.mubr.f32.mxu0 0.0
          %664 = vmatmul.mubr.f32.gmra.mxu0 %v574
          %v665 = vpop.f32.mrf.mxu0
          %v666 = vadd.f32 0.0, %v665
          %v667 = vpop.f32.mrf.mxu0
          %668 = vmatprep.mubr.f32.mxu0 0.0
          %669 = vmatmul.mubr.f32.gmra.mxu0 %v577
          %v670 = vpop.f32.mrf.mxu0
          %v671 = vadd.f32 0.0, %v670
          %v672 = vpop.f32.mrf.mxu0
          %673 = vmatprep.mubr.f32.mxu0 0.0
          %674 = vmatmul.mubr.f32.gmra.mxu0 %v580
          %v675 = vpop.f32.mrf.mxu0
          %v676 = vadd.f32 0.0, %v675
          %v677 = vpop.f32.mrf.mxu0
          %678 = vmatprep.mubr.f32.mxu0 0.0
          %679 = vmatmul.mubr.f32.gmra.mxu0 %v583
          %v680 = vpop.f32.mrf.mxu0
          %v681 = vadd.f32 0.0, %v680
          %v682 = vpop.f32.mrf.mxu0
          %683 = vmatprep.mubr.f32.mxu0 0.0
          %684 = vmatmul.mubr.f32.gmra.mxu0 %v586
          %v685 = vpop.f32.mrf.mxu0
          %v686 = vadd.f32 0.0, %v685
          %v687 = vpop.f32.mrf.mxu0
          %688 = vmatprep.mubr.f32.mxu0 0.0
          %689 = vmatmul.mubr.f32.gmra.mxu0 %v589
          %v690 = vpop.f32.mrf.mxu0
          %v691 = vadd.f32 0.0, %v690
          %v692 = vpop.f32.mrf.mxu0
          %693 = vmatprep.mubr.f32.mxu0 0.0
          %694 = vmatmul.mubr.f32.gmra.mxu0 %v592
          %v695 = vpop.f32.mrf.mxu0
          %v696 = vadd.f32 0.0, %v695
          %v697 = vpop.f32.mrf.mxu0
          %698 = vdwg.mxu0
          %v699 = vmul.f32 %v661, %v545
          %v700 = vmul.f32 %v666, %v546
          %v701 = vmul.f32 %v671, %v547
          %v702 = vmul.f32 %v676, %v548
          %v703 = vmul.f32 %v681, %v549
          %v704 = vmul.f32 %v686, %v550
          %v705 = vmul.f32 %v691, %v551
          %v706 = vmul.f32 %v696, %v552
          %vm707 = vcmask 392192
          %708 = vst.msk [vmem:[#allocation2] sm:$0xff] %vm707, %v699
          %709 = vst.msk [vmem:[#allocation2 + $0x8] sm:$0xff] %vm707, %v700
          %710 = vst.msk [vmem:[#allocation2 + $0x10] sm:$0xff] %vm707, %v701
          %711 = vst.msk [vmem:[#allocation2 + $0x18] sm:$0xff] %vm707, %v702
          %712 = vst.msk [vmem:[#allocation2 + $0x20] sm:$0xff] %vm707, %v703
          %713 = vst.msk [vmem:[#allocation2 + $0x28] sm:$0xff] %vm707, %v704
          %714 = vst.msk [vmem:[#allocation2 + $0x30] sm:$0xff] %vm707, %v705
          %715 = vst.msk [vmem:[#allocation2 + $0x38] sm:$0xff] %vm707, %v706
        $region128: #{tpu_custom_call.1} parent=115 // pred_fallthru
          _
        %v716 = vld [vmem:[%s482] sm:$0xff]
        %v717 = vld [vmem:[%s482 + $0x8] sm:$0xff]
        %v718 = vld [vmem:[%s482 + $0x10] sm:$0xff]
        %v719 = vld [vmem:[%s482 + $0x18] sm:$0xff]
        %v720 = vld [vmem:[%s482 + $0x20] sm:$0xff]
        %v721 = vld [vmem:[%s482 + $0x28] sm:$0xff]
        %v722 = vld [vmem:[%s482 + $0x30] sm:$0xff]
        %v723 = vld [vmem:[%s482 + $0x38] sm:$0xff]
        %v724 = vld [vmem:[%s419] sm:$0xff]
        %v725 = vld [vmem:[%s419 + $0x8] sm:$0xff]
        %v726 = vld [vmem:[%s419 + $0x10] sm:$0xff]
        %v727 = vld [vmem:[%s419 + $0x18] sm:$0xff]
        %v728 = vld [vmem:[%s419 + $0x20] sm:$0xff]
        %v729 = vld [vmem:[%s419 + $0x28] sm:$0xff]
        %v730 = vld [vmem:[%s419 + $0x30] sm:$0xff]
        %v731 = vld [vmem:[%s419 + $0x38] sm:$0xff]
        %v732 = vld [vmem:[#allocation2] sm:$0xff]
        %v733 = vld [vmem:[#allocation2 + $0x8] sm:$0xff]
        %v734 = vld [vmem:[#allocation2 + $0x10] sm:$0xff]
        %v735 = vld [vmem:[#allocation2 + $0x18] sm:$0xff]
        %v736 = vld [vmem:[#allocation2 + $0x20] sm:$0xff]
        %v737 = vld [vmem:[#allocation2 + $0x28] sm:$0xff]
        %v738 = vld [vmem:[#allocation2 + $0x30] sm:$0xff]
        %v739 = vld [vmem:[#allocation2 + $0x38] sm:$0xff]
        %v740 = vld [vmem:[%s426] sm:$0xff]
        %v741 = vld [vmem:[%s426 + $0x8] sm:$0xff]
        %v742 = vld [vmem:[%s426 + $0x10] sm:$0xff]
        %v743 = vld [vmem:[%s426 + $0x18] sm:$0xff]
        %v744 = vld [vmem:[%s426 + $0x20] sm:$0xff]
        %v745 = vld [vmem:[%s426 + $0x28] sm:$0xff]
        %vm746 = vcmask 392192
        %v748 = vsel %vm746, %v732, 0
        %v751 = vsel %vm746, %v733, 0
        %v754 = vsel %vm746, %v734, 0
        %v757 = vsel %vm746, %v735, 0
        %v760 = vsel %vm746, %v736, 0
        %v763 = vsel %vm746, %v737, 0
        %v766 = vsel %vm746, %v738, 0
        %v769 = vsel %vm746, %v739, 0
        %771 = vmatprep.subr.mxu0 0.0
        %772 = vmatpush1.msra.mxu0 0.0
        %773 = vmatprep.subr.mxu0 0.0
        %774 = vmatpush1.msra.mxu0 0.0
        %775 = vmatprep.subr.mxu0 0.0
        %776 = vmatpush1.msra.mxu0 0.0
        %777 = vmatprep.subr.mxu0 0.0
        %778 = vmatpush1.msra.mxu0 0.0
        %779 = vmatprep.subr.mxu0 0.0
        %780 = vmatpush1.msra.mxu0 0.0
        %781 = vmatprep.subr.mxu0 0.0
        %782 = vmatpush1.msra.mxu0 0.0
        %783 = vmatprep.subr.mxu0 0.0
        %784 = vmatpush1.msra.mxu0 0.0
        %785 = vmatprep.subr.mxu0 0.0
        %786 = vmatpush1.msra.mxu0 0.0
        %787 = vmatprep.subr.mxu0 0.0
        %788 = vmatpush1.msra.mxu0 0.0
        %789 = vmatprep.subr.mxu0 0.0
        %790 = vmatpush1.msra.mxu0 0.0
        %791 = vmatprep.subr.mxu0 0.0
        %792 = vmatpush1.msra.mxu0 %v745
        %793 = vmatprep.subr.mxu0 0.0
        %794 = vmatpush1.msra.mxu0 %v744
        %795 = vmatprep.subr.mxu0 0.0
        %796 = vmatpush1.msra.mxu0 %v743
        %797 = vmatprep.subr.mxu0 0.0
        %798 = vmatpush1.msra.mxu0 %v742
        %799 = vmatprep.subr.mxu0 0.0
        %800 = vmatpush1.msra.mxu0 %v741
        %801 = vmatprep.subr.mxu0 0.0
        %802 = vmatpush1.msra.mxu0 %v740
        %803 = vmatprep.subr.mxu0 0.0
        %804 = vmatpush2.msra.mxu0 0.0
        %805 = vmatprep.subr.mxu0 0.0
        %806 = vmatpush2.msra.mxu0 0.0
        %807 = vmatprep.subr.mxu0 0.0
        %808 = vmatpush2.msra.mxu0 0.0
        %809 = vmatprep.subr.mxu0 0.0
        %810 = vmatpush2.msra.mxu0 0.0
        %811 = vmatprep.subr.mxu0 0.0
        %812 = vmatpush2.msra.mxu0 0.0
        %813 = vmatprep.subr.mxu0 0.0
        %814 = vmatpush2.msra.mxu0 0.0
        %815 = vmatprep.subr.mxu0 0.0
        %816 = vmatpush2.msra.mxu0 0.0
        %817 = vmatprep.subr.mxu0 0.0
        %818 = vmatpush2.msra.mxu0 0.0
        %819 = vmatprep.subr.mxu0 0.0
        %820 = vmatpush2.msra.mxu0 0.0
        %821 = vmatprep.subr.mxu0 0.0
        %822 = vmatpush2.msra.mxu0 0.0
        %823 = vmatprep.subr.mxu0 0.0
        %824 = vmatpush2.msra.mxu0 0.0
        %825 = vmatprep.subr.mxu0 0.0
        %826 = vmatpush2.msra.mxu0 0.0
        %827 = vmatprep.subr.mxu0 0.0
        %828 = vmatpush2.msra.mxu0 0.0
        %829 = vmatprep.subr.mxu0 0.0
        %830 = vmatpush2.msra.mxu0 0.0
        %831 = vmatprep.subr.mxu0 0.0
        %832 = vmatpush2.msra.mxu0 0.0
        %833 = vmatprep.subr.mxu0 0.0
        %834 = vmatpush2.msra.mxu0 0.0
        %835 = vmatprep.mubr.f32.mxu0 0.0
        %836 = vmatmul.mubr.f32.gmra.mxu0 %v748
        %v837 = vpop.f32.mrf.mxu0
        %v838 = vadd.f32 0.0, %v837
        %v839 = vpop.f32.mrf.mxu0
        %840 = vmatprep.mubr.f32.mxu0 0.0
        %841 = vmatmul.mubr.f32.gmra.mxu0 %v751
        %v842 = vpop.f32.mrf.mxu0
        %v843 = vadd.f32 0.0, %v842
        %v844 = vpop.f32.mrf.mxu0
        %845 = vmatprep.mubr.f32.mxu0 0.0
        %846 = vmatmul.mubr.f32.gmra.mxu0 %v754
        %v847 = vpop.f32.mrf.mxu0
        %v848 = vadd.f32 0.0, %v847
        %v849 = vpop.f32.mrf.mxu0
        %850 = vmatprep.mubr.f32.mxu0 0.0
        %851 = vmatmul.mubr.f32.gmra.mxu0 %v757
        %v852 = vpop.f32.mrf.mxu0
        %v853 = vadd.f32 0.0, %v852
        %v854 = vpop.f32.mrf.mxu0
        %855 = vmatprep.mubr.f32.mxu0 0.0
        %856 = vmatmul.mubr.f32.gmra.mxu0 %v760
        %v857 = vpop.f32.mrf.mxu0
        %v858 = vadd.f32 0.0, %v857
        %v859 = vpop.f32.mrf.mxu0
        %860 = vmatprep.mubr.f32.mxu0 0.0
        %861 = vmatmul.mubr.f32.gmra.mxu0 %v763
        %v862 = vpop.f32.mrf.mxu0
        %v863 = vadd.f32 0.0, %v862
        %v864 = vpop.f32.mrf.mxu0
        %865 = vmatprep.mubr.f32.mxu0 0.0
        %866 = vmatmul.mubr.f32.gmra.mxu0 %v766
        %v867 = vpop.f32.mrf.mxu0
        %v868 = vadd.f32 0.0, %v867
        %v869 = vpop.f32.mrf.mxu0
        %870 = vmatprep.mubr.f32.mxu0 0.0
        %871 = vmatmul.mubr.f32.gmra.mxu0 %v769
        %v872 = vpop.f32.mrf.mxu0
        %v873 = vadd.f32 0.0, %v872
        %v874 = vpop.f32.mrf.mxu0
        %875 = vdwg.mxu0
        %v876 = vld [vmem:[%s486] sm:$0x1]
        %v878 = vlaneseq
        %v879 = vshrl.u32 %v878, 7
        %v880 = vsub.s32 0, %v879
        %v881 = vrot.slane %v876, %v880
        %vm883 = vcmask 523264
        %v885 = vsel %vm883, %v716, 0
        %v888 = vsel %vm883, %v717, 0
        %v891 = vsel %vm883, %v718, 0
        %v894 = vsel %vm883, %v719, 0
        %v897 = vsel %vm883, %v720, 0
        %v900 = vsel %vm883, %v721, 0
        %v903 = vsel %vm883, %v722, 0
        %v906 = vsel %vm883, %v723, 0
        %908 = vmatprep.subr.mxu0 0.0
        %909 = vmatpush1.msra.mxu0 0.0
        %910 = vmatprep.subr.mxu0 0.0
        %911 = vmatpush1.msra.mxu0 0.0
        %912 = vmatprep.subr.mxu0 0.0
        %913 = vmatpush1.msra.mxu0 0.0
        %914 = vmatprep.subr.mxu0 0.0
        %915 = vmatpush1.msra.mxu0 0.0
        %916 = vmatprep.subr.mxu0 0.0
        %917 = vmatpush1.msra.mxu0 0.0
        %918 = vmatprep.subr.mxu0 0.0
        %919 = vmatpush1.msra.mxu0 0.0
        %920 = vmatprep.subr.mxu0 0.0
        %921 = vmatpush1.msra.mxu0 0.0
        %922 = vmatprep.subr.mxu0 0.0
        %923 = vmatpush1.msra.mxu0 0.0
        %924 = vmatprep.subr.mxu0 0.0
        %925 = vmatpush1.msra.mxu0 %v731
        %926 = vmatprep.subr.mxu0 0.0
        %927 = vmatpush1.msra.mxu0 %v730
        %928 = vmatprep.subr.mxu0 0.0
        %929 = vmatpush1.msra.mxu0 %v729
        %930 = vmatprep.subr.mxu0 0.0
        %931 = vmatpush1.msra.mxu0 %v728
        %932 = vmatprep.subr.mxu0 0.0
        %933 = vmatpush1.msra.mxu0 %v727
        %934 = vmatprep.subr.mxu0 0.0
        %935 = vmatpush1.msra.mxu0 %v726
        %936 = vmatprep.subr.mxu0 0.0
        %937 = vmatpush1.msra.mxu0 %v725
        %938 = vmatprep.subr.mxu0 0.0
        %939 = vmatpush1.msra.mxu0 %v724
        %940 = vmatprep.subr.mxu0 0.0
        %941 = vmatpush2.msra.mxu0 0.0
        %942 = vmatprep.subr.mxu0 0.0
        %943 = vmatpush2.msra.mxu0 0.0
        %944 = vmatprep.subr.mxu0 0.0
        %945 = vmatpush2.msra.mxu0 0.0
        %946 = vmatprep.subr.mxu0 0.0
        %947 = vmatpush2.msra.mxu0 0.0
        %948 = vmatprep.subr.mxu0 0.0
        %949 = vmatpush2.msra.mxu0 0.0
        %950 = vmatprep.subr.mxu0 0.0
        %951 = vmatpush2.msra.mxu0 0.0
        %952 = vmatprep.subr.mxu0 0.0
        %953 = vmatpush2.msra.mxu0 0.0
        %954 = vmatprep.subr.mxu0 0.0
        %955 = vmatpush2.msra.mxu0 0.0
        %956 = vmatprep.subr.mxu0 0.0
        %957 = vmatpush2.msra.mxu0 0.0
        %958 = vmatprep.subr.mxu0 0.0
        %959 = vmatpush2.msra.mxu0 0.0
        %960 = vmatprep.subr.mxu0 0.0
        %961 = vmatpush2.msra.mxu0 0.0
        %962 = vmatprep.subr.mxu0 0.0
        %963 = vmatpush2.msra.mxu0 0.0
        %964 = vmatprep.subr.mxu0 0.0
        %965 = vmatpush2.msra.mxu0 0.0
        %966 = vmatprep.subr.mxu0 0.0
        %967 = vmatpush2.msra.mxu0 0.0
        %968 = vmatprep.subr.mxu0 0.0
        %969 = vmatpush2.msra.mxu0 0.0
        %970 = vmatprep.subr.mxu0 0.0
        %971 = vmatpush2.msra.mxu0 0.0
        %972 = vmatprep.mubr.f32.mxu0 0.0
        %973 = vmatmul.mubr.f32.gmra.mxu0 %v885
        %v974 = vpop.f32.mrf.mxu0
        %v975 = vadd.f32 %v881, %v974
        %v976 = vpop.f32.mrf.mxu0
        %977 = vmatprep.mubr.f32.mxu0 0.0
        %978 = vmatmul.mubr.f32.gmra.mxu0 %v888
        %v979 = vpop.f32.mrf.mxu0
        %v980 = vadd.f32 %v881, %v979
        %v981 = vpop.f32.mrf.mxu0
        %982 = vmatprep.mubr.f32.mxu0 0.0
        %983 = vmatmul.mubr.f32.gmra.mxu0 %v891
        %v984 = vpop.f32.mrf.mxu0
        %v985 = vadd.f32 %v881, %v984
        %v986 = vpop.f32.mrf.mxu0
        %987 = vmatprep.mubr.f32.mxu0 0.0
        %988 = vmatmul.mubr.f32.gmra.mxu0 %v894
        %v989 = vpop.f32.mrf.mxu0
        %v990 = vadd.f32 %v881, %v989
        %v991 = vpop.f32.mrf.mxu0
        %992 = vmatprep.mubr.f32.mxu0 0.0
        %993 = vmatmul.mubr.f32.gmra.mxu0 %v897
        %v994 = vpop.f32.mrf.mxu0
        %v995 = vadd.f32 %v881, %v994
        %v996 = vpop.f32.mrf.mxu0
        %997 = vmatprep.mubr.f32.mxu0 0.0
        %998 = vmatmul.mubr.f32.gmra.mxu0 %v900
        %v999 = vpop.f32.mrf.mxu0
        %v1000 = vadd.f32 %v881, %v999
        %v1001 = vpop.f32.mrf.mxu0
        %1002 = vmatprep.mubr.f32.mxu0 0.0
        %1003 = vmatmul.mubr.f32.gmra.mxu0 %v903
        %v1004 = vpop.f32.mrf.mxu0
        %v1005 = vadd.f32 %v881, %v1004
        %v1006 = vpop.f32.mrf.mxu0
        %1007 = vmatprep.mubr.f32.mxu0 0.0
        %1008 = vmatmul.mubr.f32.gmra.mxu0 %v906
        %v1009 = vpop.f32.mrf.mxu0
        %v1010 = vadd.f32 %v881, %v1009
        %v1011 = vpop.f32.mrf.mxu0
        %1012 = vdwg.mxu0
        %v1013 = vadd.f32 %v975, %v838
        %v1014 = vadd.f32 %v980, %v843
        %v1015 = vadd.f32 %v985, %v848
        %v1016 = vadd.f32 %v990, %v853
        %v1017 = vadd.f32 %v995, %v858
        %v1018 = vadd.f32 %v1000, %v863
        %v1019 = vadd.f32 %v1005, %v868
        %v1020 = vadd.f32 %v1010, %v873
        %1021 = vst [vmem:[%s471] sm:$0xff] %v1013
        %1022 = vst [vmem:[%s471 + $0x8] sm:$0xff] %v1014
        %1023 = vst [vmem:[%s471 + $0x10] sm:$0xff] %v1015
        %1024 = vst [vmem:[%s471 + $0x18] sm:$0xff] %v1016
        %1025 = vst [vmem:[%s471 + $0x20] sm:$0xff] %v1017
        %1026 = vst [vmem:[%s471 + $0x28] sm:$0xff] %v1018
        %1027 = vst [vmem:[%s471 + $0x30] sm:$0xff] %v1019
        %1028 = vst [vmem:[%s471 + $0x38] sm:$0xff] %v1020
        %s1029 = sand.u32 %s215, 1
        %s1030 = scalar_lea.sflag [#allocation6], %s1029
        %s1031 = sand.u32 %s215, 1
        %s1032 = smul.addr %s1031, 64
        %s1033 = scalar_lea.vmem [#allocation5], %s1032
        // Predicated region
        $region129: #{tpu_custom_call.1} parent=115 // pred_check
          %p1034 = pneg %p225
        $region130: #{tpu_custom_call.1} parent=115 // pred_check_branch
          %1036 = sbr.rel (%p1034) target = $region132
        $region131: #{tpu_custom_call.1} parent=115 // pred_region
          %s1037 = smul.u32 8, %s25
          %s1039 = ssub.s32 1024, 1024
          %1040 = vsyncadd %s1030, %s1039
          %s1041 = smul.addr %s1037, 2
          %s1042 = sadd.s32 %s26, %s1041
          %s1043 = smul.addr %s1042, 128
          %s1044 = scalar_lea.hbm %s7, %s1043
          %s1045 = sshll.u32 %s1033, 4
          %s1046 = int_to_ptr.vmem [resolvable:$true] %s1045
          %1051 = dma.vmem_to_hbm [thread:$0]  %s1046, 1024, %s1044, %s1030, 128, 256, 8
        $region132: #{tpu_custom_call.1} parent=115 // pred_fallthru
          _
      $region116: #{tpu_custom_call.1} parent=5 // pred_fallthru
        _
      %p1052 = scmp.le.s32.totalorder 2, %s16
      // Predicated region
      $region133: #{tpu_custom_call.1} parent=5 // pred_check
        %p1053 = pneg %p1052
      $region134: #{tpu_custom_call.1} parent=5 // pred_check_branch
        %1055 = sbr.rel (%p1053) target = $region136
      $region135: #{tpu_custom_call.1} parent=5 // pred_region
        %s1056 = ssub.s32 %s16, 2
        // Predicated region
        $region137: #{tpu_custom_call.1} parent=135 // pred_check
          %p1057 = pneg %p231
        $region138: #{tpu_custom_call.1} parent=135 // pred_check_branch
          %1059 = sbr.rel (%p1057) target = $region140
        $region139: #{tpu_custom_call.1} parent=135 // pred_region
          %s1060 = sand.u32 %s216, 1
          %s1061 = scalar_lea.sflag [#allocation6], %s1060
          %s1062 = sand.u32 %s216, 1
          %s1063 = smul.addr %s1062, 64
          %s1064 = scalar_lea.vmem [#allocation5], %s1063
          %1065 = dma.done %s1061, 1024
        $region140: #{tpu_custom_call.1} parent=135 // pred_fallthru
          _
      $region136: #{tpu_custom_call.1} parent=5 // pred_fallthru
        _
    $region6: #{tpu_custom_call.1} parent=1 // loop_footer
      %s20 = sadd.s32 1, %s16
    $region7: #{tpu_custom_call.1} parent=1 // loop_footer_branch
      %15 = sbr.rel target = $region3
    $region8: #{tpu_custom_call.1} parent=1 // loop_exit
      _
    %1066 = vsyncpa [#allocation6], 1
    %s1067 = scalar_lea.sflag [#allocation6], 1
    %1068 = vsyncpa %s1067, 1

</llo_original>
